<compile_context>
chip_gen: v7x
topology: tpu7x:2x2x1
jax: 0.10.0
libtpu: 0.0.40
codegen_flags: <defaults>
</compile_context>

<pallas_src>
import jax
import jax.numpy as jnp
import numpy as np
from jax.experimental import pallas as pl
from jax.experimental.pallas import tpu as pltpu

N_OUT = 8  # padded output width (3 useful columns; 8 keeps sublane alignment)


def _round_up(x, m):
    return ((x + m - 1) // m) * m


def prepare_controller_params(w, b, compute_dtype=jnp.float32):
    """One-time parameter preprocessing (NOT part of the per-call hot path).

    w: (zd + hd, 3), b: (3,)  ->  w_pad: (zd + hd, N_OUT) [compute_dtype],
                                  b_pad: (1, N_OUT)       [f32]
    """
    k, n = w.shape
    assert n <= N_OUT
    w_pad = jnp.pad(w.astype(jnp.float32), ((0, 0), (0, N_OUT - n)))
    w_pad = w_pad.astype(compute_dtype)
    b_pad = jnp.pad(b.astype(jnp.float32), (0, N_OUT - n)).reshape(1, N_OUT)
    assert w_pad.shape == (k, N_OUT) and b_pad.shape == (1, N_OUT)
    return w_pad, b_pad


def controller_kernel(z_ref, h_ref, w_ref, b_ref, o_ref):
    zd = z_ref.shape[1]

    # fc1 on cat(z, h)  ==  z @ W[:zd] + h @ W[zd:]  (+ bias), on the MXU.
    # Slice the *ref* (zero-cost, sublane-aligned views), not a loaded value.
    y = (jnp.dot(z_ref[...], w_ref[:zd, :], preferred_element_type=jnp.float32)
         + jnp.dot(h_ref[...], w_ref[zd:, :], preferred_element_type=jnp.float32)
         + b_ref[...])

    t = jnp.tanh(y)                       # out = tanh(fc1(x))       (EUP)
    # sigmoid(t) == 0.5 * (1 + tanh(0.5 * t)): tanh-only epilogue (no exp/recip).
    s = 0.5 * (jnp.tanh(0.5 * t) + 1.0)

    # column 0: steer = tanh ; columns 1,2 (and padding, sliced off): sigmoid
    col = jax.lax.broadcasted_iota(jnp.int32, t.shape, dimension=1)
    o_ref[...] = jnp.where(col == 0, t, s).astype(o_ref.dtype)


def controller_forward(z, h, w_pad, b_pad, *, batch_tile=1024, small_batch_max=256):
    """z: (B, zd), h: (B, hd), w_pad: (zd+hd, N_OUT), b_pad: (1, N_OUT) -> (B, 3)"""
    B, zd = z.shape
    _, hd = h.shape
    assert w_pad.shape == (zd + hd, N_OUT) and b_pad.shape == (1, N_OUT)

    # Match the weights' compute dtype (bf16 halves input DMA bytes on v6e/v7x;
    # accumulation is f32 either way via preferred_element_type).
    z = z.astype(w_pad.dtype)
    h = h.astype(w_pad.dtype)

    if B <= small_batch_max:
        # Small / single-shot path: whole arrays resident in VMEM, no grid,
        # no pipeline prologue/epilogue, no double buffering.
        out_padded = pl.pallas_call(
            controller_kernel,
            out_shape=jax.ShapeDtypeStruct((B, N_OUT), jnp.float32),
            in_specs=[pl.BlockSpec(memory_space=pltpu.MemorySpace.VMEM)] * 4,
            out_specs=pl.BlockSpec(memory_space=pltpu.MemorySpace.VMEM),
        )(z, h, w_pad, b_pad)
        return out_padded[:, :3]

    # Large-batch path: tile the batch and mark it parallel so v7x's two
    # TensorCores share it.  Cap the tile at ceil(B/2) so the grid always has
    # >= 2 steps; pad B up to a multiple of the tile (bounded VMEM, no
    # whole-array fallback for unaligned batches).
    tb = min(batch_tile, _round_up(pl.cdiv(B, 2), 8))
    B_padded = _round_up(B, tb)
    if B_padded != B:
        z = jnp.pad(z, ((0, B_padded - B), (0, 0)))
        h = jnp.pad(h, ((0, B_padded - B), (0, 0)))

    out_padded = pl.pallas_call(
        controller_kernel,
        out_shape=jax.ShapeDtypeStruct((B_padded, N_OUT), jnp.float32),
        grid=(B_padded // tb,),
        in_specs=[
            pl.BlockSpec((tb, zd), lambda i: (i, 0)),
            pl.BlockSpec((tb, hd), lambda i: (i, 0)),
            pl.BlockSpec((zd + hd, N_OUT), lambda i: (0, 0)),   # grid-invariant
            pl.BlockSpec((1, N_OUT), lambda i: (0, 0)),         # grid-invariant
        ],
        out_specs=pl.BlockSpec((tb, N_OUT), lambda i: (i, 0)),
        compiler_params=pltpu.CompilerParams(
            dimension_semantics=("parallel",)),
    )(z, h, w_pad, b_pad)
    return out_padded[:B, :3]


def controller_reference(z, h, w, b):
    x = jnp.concatenate([z, h], axis=1)
    out = jnp.tanh(x @ w + b)
    steer = out[:, 0]
    gas = jax.nn.sigmoid(out[:, 1])
    brake = jax.nn.sigmoid(out[:, 2])
    return jnp.stack([steer, gas, brake], axis=1)


if __name__ == "__main__":
    B, Z_DIM, H_DIM = 2, 32, 32

    key = jax.random.PRNGKey(0)
    kz, kh, kw, kb = jax.random.split(key, 4)

    z = jax.random.normal(kz, (B, Z_DIM), jnp.float32)
    h = jax.random.normal(kh, (B, H_DIM), jnp.float32)

    # Deterministic parameter init for nn.Linear(z_dim + h_dim, 3)
    fan_in = Z_DIM + H_DIM
    bound = 1.0 / np.sqrt(fan_in)
    w = jax.random.uniform(kw, (fan_in, 3), jnp.float32, -bound, bound)
    b = jax.random.uniform(kb, (3,), jnp.float32, -bound, bound)

    # One-time parameter preprocessing (hoisted out of the forward pass).
    w_f32, b_f32 = prepare_controller_params(w, b, jnp.float32)
    w_bf16, b_bf16 = prepare_controller_params(w, b, jnp.bfloat16)
    jax.block_until_ready((w_f32, b_f32, w_bf16, b_bf16))

    # --- Small-batch (gridless) path, f32 exact-parity. ---
    out = controller_forward(z, h, w_f32, b_f32)
    out = jax.block_until_ready(out)
    ref = controller_reference(z, h, w, b)
    np.testing.assert_allclose(np.asarray(out), np.asarray(ref),
                               rtol=1e-5, atol=1e-5)

    # --- Large-batch (batch-tiled, "parallel", grid >= 2) path, f32. ---
    B2 = 1024
    kz2, kh2 = jax.random.split(jax.random.PRNGKey(1), 2)
    z2 = jax.random.normal(kz2, (B2, Z_DIM), jnp.float32)
    h2 = jax.random.normal(kh2, (B2, H_DIM), jnp.float32)
    out2 = controller_forward(z2, h2, w_f32, b_f32, batch_tile=1024)
    out2 = jax.block_until_ready(out2)
    ref2 = controller_reference(z2, h2, w, b)
    np.testing.assert_allclose(np.asarray(out2), np.asarray(ref2),
                               rtol=1e-4, atol=1e-5)

    # --- Large-batch bf16-input path (v6e/v7x-friendly), looser tolerance. ---
    out3 = controller_forward(z2, h2, w_bf16, b_bf16, batch_tile=1024)
    out3 = jax.block_until_ready(out3)
    np.testing.assert_allclose(np.asarray(out3), np.asarray(ref2),
                               rtol=2e-2, atol=2e-2)

    # --- Unaligned batch goes through the padded tiled path (no VMEM blowup). ---
    B3 = 515
    z3 = jax.random.normal(kz2, (B3, Z_DIM), jnp.float32)
    h3 = jax.random.normal(kh2, (B3, H_DIM), jnp.float32)
    out4 = controller_forward(z3, h3, w_f32, b_f32, batch_tile=1024)
    out4 = jax.block_until_ready(out4)
    ref4 = controller_reference(z3, h3, w, b)
    np.testing.assert_allclose(np.asarray(out4), np.asarray(ref4),
                               rtol=1e-4, atol=1e-5)

    print("KERNEL_OK")
</pallas_src>

<mosaic_0001>
module attributes {stable_mosaic.version = 11 : i64} {
  func.func @controller_kernel(%arg0: memref<2x32xf32, #tpu.memory_space<vmem>>, %arg1: memref<2x32xf32, #tpu.memory_space<vmem>>, %arg2: memref<64x8xf32, #tpu.memory_space<vmem>>, %arg3: memref<1x8xf32, #tpu.memory_space<vmem>>, %arg4: memref<2x8xf32, #tpu.memory_space<vmem>>) attributes {dimension_semantics = [], scalar_prefetch = 0 : i64, scratch_operands = 0 : i64, tpu.core_type = #tpu.core_type<tc>} {
    %c0 = arith.constant 0 : index
    %c0_0 = arith.constant 0 : index
    %0 = vector.load %arg0[%c0, %c0_0] : memref<2x32xf32, #tpu.memory_space<vmem>>, vector<2x32xf32>
    %c0_1 = arith.constant 0 : index
    %c0_2 = arith.constant 0 : index
    %1 = vector.load %arg2[%c0_1, %c0_2] : memref<64x8xf32, #tpu.memory_space<vmem>>, vector<32x8xf32>
    %cst = arith.constant dense<0.000000e+00> : vector<2x8xf32>
    %2 = tpu.matmul %0, %1, %cst {dimension_numbers = #tpu.dot_dimension_numbers<[1], [0], [0], [1], [0, 0, 1, 1], [], []>} : vector<2x32xf32>, vector<32x8xf32>, vector<2x8xf32> -> vector<2x8xf32>
    %c0_3 = arith.constant 0 : index
    %c0_4 = arith.constant 0 : index
    %3 = vector.load %arg1[%c0_3, %c0_4] : memref<2x32xf32, #tpu.memory_space<vmem>>, vector<2x32xf32>
    %c32 = arith.constant 32 : index
    %c0_5 = arith.constant 0 : index
    %4 = vector.load %arg2[%c32, %c0_5] : memref<64x8xf32, #tpu.memory_space<vmem>>, vector<32x8xf32>
    %cst_6 = arith.constant dense<0.000000e+00> : vector<2x8xf32>
    %5 = tpu.matmul %3, %4, %cst_6 {dimension_numbers = #tpu.dot_dimension_numbers<[1], [0], [0], [1], [0, 0, 1, 1], [], []>} : vector<2x32xf32>, vector<32x8xf32>, vector<2x8xf32> -> vector<2x8xf32>
    %6 = arith.addf %2, %5 : vector<2x8xf32>
    %c0_7 = arith.constant 0 : index
    %c0_8 = arith.constant 0 : index
    %7 = vector.load %arg3[%c0_7, %c0_8] : memref<1x8xf32, #tpu.memory_space<vmem>>, vector<1x8xf32>
    %8 = vector.broadcast %7 : vector<1x8xf32> to vector<2x8xf32>
    %9 = arith.addf %6, %8 : vector<2x8xf32>
    %10 = math.tanh %9 : vector<2x8xf32>
    %cst_9 = arith.constant 5.000000e-01 : f32
    %11 = vector.broadcast %cst_9 : f32 to vector<2x8xf32>
    %12 = arith.mulf %11, %10 : vector<2x8xf32>
    %13 = math.tanh %12 : vector<2x8xf32>
    %cst_10 = arith.constant 1.000000e+00 : f32
    %14 = vector.broadcast %cst_10 : f32 to vector<2x8xf32>
    %15 = arith.addf %13, %14 : vector<2x8xf32>
    %cst_11 = arith.constant 5.000000e-01 : f32
    %16 = vector.broadcast %cst_11 : f32 to vector<2x8xf32>
    %17 = arith.mulf %16, %15 : vector<2x8xf32>
    %18 = tpu.iota {dimensions = array<i32: 1>} : vector<2x8xi32>
    %c0_i32 = arith.constant 0 : i32
    %19 = vector.broadcast %c0_i32 : i32 to vector<2x8xi32>
    %20 = arith.cmpi eq, %18, %19 : vector<2x8xi32>
    %21 = arith.select %20, %10, %17 : vector<2x8xi1>, vector<2x8xf32>
    %c0_12 = arith.constant 0 : index
    %c0_13 = arith.constant 0 : index
    %22 = vector.load %arg4[%c0_12, %c0_13] : memref<2x8xf32, #tpu.memory_space<vmem>>, vector<2x8xf32>
    tpu.vector_store %arg4[%c0_12, %c0_13], %21 {strides = array<i32>} : memref<2x8xf32, #tpu.memory_space<vmem>>, vector<2x8xf32>,
    return
  }
}

</mosaic_0001>

<llo_original>
// kernel: tpu_custom_call.1
$region0: #{tpu_custom_call.1}
  #allocation0 [shape = 'u32[]', space=smem, size = 0x4, offset = 0x4, fixed_abs, tag = 'smem constant byte address 0x4 - core index']
  #allocation1 [shape = 'u32[144,128]{1,0:T(1,128)}', space=vmem, size = 0x12000, scoped, tag = 'internal scratch']
  %s0 = inlined_call_operand.vmem [shape: f32[2,32], index: 0, kind: input, shape index: {}]
  %s1 = inlined_call_operand.vmem [shape: f32[2,32], index: 1, kind: input, shape index: {}]
  %s2 = inlined_call_operand.vmem [shape: f32[64,8], index: 2, kind: input, shape index: {}]
  %s3 = inlined_call_operand.vmem [shape: f32[1,8], index: 3, kind: input, shape index: {}]
  %s4 = inlined_call_operand.hbm [shape: f32[2,8], index: 4, kind: output, shape index: {}]
  %s5 = sld [smem:[#allocation0]]
  $region26: #{tpu_custom_call.1} parent=0
    _
  %s7 = ssub.s32 1, %s5
  %s8 = scalar_select 0, %s7, %s5
  $region1: #{tpu_custom_call.1} parent=0
    #allocation2 [shape = 'u8[1024]{0}', space=vmem, size = 0x400, scoped, tag = 'output window, operand 0, single buffered']
    #allocation3 [shape = 's32[1]{0}', space=sflag, size = 0x4, scoped, tag = 'scoped memory for tpu_custom_call.1']
    %9 = vsyncpa [#allocation3], 0
    // Predicated region
    $region2: #{tpu_custom_call.1} parent=1 // pred_check
      _
    $region3: #{tpu_custom_call.1} parent=1 // pred_check_branch
      %11 = sbr.rel (0) target = $region5
    $region4: #{tpu_custom_call.1} parent=1 // pred_region
      _
    $region5: #{tpu_custom_call.1} parent=1 // pred_fallthru
      _
    // Predicated region
    $region6: #{tpu_custom_call.1} parent=1 // pred_check
      _
    $region7: #{tpu_custom_call.1} parent=1 // pred_check_branch
      %13 = sbr.rel (0) target = $region9
    $region8: #{tpu_custom_call.1} parent=1 // pred_region
      _
    $region9: #{tpu_custom_call.1} parent=1 // pred_fallthru
      _
    // Predicated region
    $region10: #{tpu_custom_call.1} parent=1 // pred_check
      _
    $region11: #{tpu_custom_call.1} parent=1 // pred_check_branch
      %15 = sbr.rel (0) target = $region13
    $region12: #{tpu_custom_call.1} parent=1 // pred_region
      _
    $region13: #{tpu_custom_call.1} parent=1 // pred_fallthru
      _
    // Predicated region
    $region14: #{tpu_custom_call.1} parent=1 // pred_check
      _
    $region15: #{tpu_custom_call.1} parent=1 // pred_check_branch
      %17 = sbr.rel (0) target = $region17
    $region16: #{tpu_custom_call.1} parent=1 // pred_region
      _
    $region17: #{tpu_custom_call.1} parent=1 // pred_fallthru
      _
    %v18 = vld [vmem:[%s0] sm:$0x3]
    %v19 = vld [vmem:[%s2] sm:$0xff]
    %v20 = vld [vmem:[%s2 + $0x8] sm:$0xff]
    %v21 = vld [vmem:[%s2 + $0x10] sm:$0xff]
    %v22 = vld [vmem:[%s2 + $0x18] sm:$0xff]
    %v23 = vld [vmem:[%s1] sm:$0x3]
    %v24 = vld [vmem:[%s2 + $0x20] sm:$0xff]
    %v25 = vld [vmem:[%s2 + $0x28] sm:$0xff]
    %v26 = vld [vmem:[%s2 + $0x30] sm:$0xff]
    %v27 = vld [vmem:[%s2 + $0x38] sm:$0xff]
    %vm28 = vcmask 261120
    %v30 = vsel %vm28, %v23, 0
    %32 = vmatprep.subr.mxu0 0.0
    %33 = vmatpush1.msra.mxu0 %v24
    %34 = vmatprep.subr.mxu0 0.0
    %35 = vmatpush1.msra.mxu0 %v25
    %36 = vmatprep.subr.mxu0 0.0
    %37 = vmatpush1.msra.mxu0 %v26
    %38 = vmatprep.subr.mxu0 0.0
    %39 = vmatpush1.msra.mxu0 %v27
    %40 = vmatprep.subr.mxu0 0.0
    %41 = vmatpush1.msra.mxu0 0.0
    %42 = vmatprep.subr.mxu0 0.0
    %43 = vmatpush1.msra.mxu0 0.0
    %44 = vmatprep.subr.mxu0 0.0
    %45 = vmatpush1.msra.mxu0 0.0
    %46 = vmatprep.subr.mxu0 0.0
    %47 = vmatpush1.msra.mxu0 0.0
    %48 = vmatprep.subr.mxu0 0.0
    %49 = vmatpush1.msra.mxu0 0.0
    %50 = vmatprep.subr.mxu0 0.0
    %51 = vmatpush1.msra.mxu0 0.0
    %52 = vmatprep.subr.mxu0 0.0
    %53 = vmatpush1.msra.mxu0 0.0
    %54 = vmatprep.subr.mxu0 0.0
    %55 = vmatpush1.msra.mxu0 0.0
    %56 = vmatprep.subr.mxu0 0.0
    %57 = vmatpush1.msra.mxu0 0.0
    %58 = vmatprep.subr.mxu0 0.0
    %59 = vmatpush1.msra.mxu0 0.0
    %60 = vmatprep.subr.mxu0 0.0
    %61 = vmatpush1.msra.mxu0 0.0
    %62 = vmatprep.subr.mxu0 0.0
    %63 = vmatpush1.msra.mxu0 0.0
    %64 = vmatprep.subr.mxu0 0.0
    %65 = vmatpush1.msra.mxu0 0.0
    %66 = vmatprep.subr.mxu0 0.0
    %67 = vmatpush1.msra.mxu0 0.0
    %68 = vmatprep.subr.mxu0 0.0
    %69 = vmatpush1.msra.mxu0 0.0
    %70 = vmatprep.subr.mxu0 0.0
    %71 = vmatpush1.msra.mxu0 0.0
    %72 = vmatprep.subr.mxu0 0.0
    %73 = vmatpush1.msra.mxu0 0.0
    %74 = vmatprep.subr.mxu0 0.0
    %75 = vmatpush1.msra.mxu0 0.0
    %76 = vmatprep.subr.mxu0 0.0
    %77 = vmatpush1.msra.mxu0 0.0
    %78 = vmatprep.subr.mxu0 0.0
    %79 = vmatpush1.msra.mxu0 0.0
    %80 = vmatprep.subr.mxu0 0.0
    %81 = vmatpush1.msra.mxu0 0.0
    %82 = vmatprep.subr.mxu0 0.0
    %83 = vmatpush1.msra.mxu0 0.0
    %84 = vmatprep.subr.mxu0 0.0
    %85 = vmatpush1.msra.mxu0 0.0
    %86 = vmatprep.subr.mxu0 0.0
    %87 = vmatpush1.msra.mxu0 0.0
    %88 = vmatprep.subr.mxu0 0.0
    %89 = vmatpush1.msra.mxu0 0.0
    %90 = vmatprep.subr.mxu0 0.0
    %91 = vmatpush1.msra.mxu0 0.0
    %92 = vmatprep.subr.mxu0 0.0
    %93 = vmatpush1.msra.mxu0 0.0
    %94 = vmatprep.subr.mxu0 0.0
    %95 = vmatpush1.msra.mxu0 0.0
    %96 = vmatprep.mubr.f32.mxu0 0.0
    %97 = vmatmul.mubr.f32.gmra.mrb[0].mxu0 %v30
    %v98 = vpop.f32.mrb[0].mxu0
    %v99 = vadd.f32 0.0, %v98
    %v100 = vpop.f32.mrb[0].mxu0
    %101 = vdwg.mxu0
    %v103 = vsel %vm28, %v18, 0
    %105 = vmatprep.subr.mxu0 0.0
    %106 = vmatpush1.msra.mxu0 %v19
    %107 = vmatprep.subr.mxu0 0.0
    %108 = vmatpush1.msra.mxu0 %v20
    %109 = vmatprep.subr.mxu0 0.0
    %110 = vmatpush1.msra.mxu0 %v21
    %111 = vmatprep.subr.mxu0 0.0
    %112 = vmatpush1.msra.mxu0 %v22
    %113 = vmatprep.subr.mxu0 0.0
    %114 = vmatpush1.msra.mxu0 0.0
    %115 = vmatprep.subr.mxu0 0.0
    %116 = vmatpush1.msra.mxu0 0.0
    %117 = vmatprep.subr.mxu0 0.0
    %118 = vmatpush1.msra.mxu0 0.0
    %119 = vmatprep.subr.mxu0 0.0
    %120 = vmatpush1.msra.mxu0 0.0
    %121 = vmatprep.subr.mxu0 0.0
    %122 = vmatpush1.msra.mxu0 0.0
    %123 = vmatprep.subr.mxu0 0.0
    %124 = vmatpush1.msra.mxu0 0.0
    %125 = vmatprep.subr.mxu0 0.0
    %126 = vmatpush1.msra.mxu0 0.0
    %127 = vmatprep.subr.mxu0 0.0
    %128 = vmatpush1.msra.mxu0 0.0
    %129 = vmatprep.subr.mxu0 0.0
    %130 = vmatpush1.msra.mxu0 0.0
    %131 = vmatprep.subr.mxu0 0.0
    %132 = vmatpush1.msra.mxu0 0.0
    %133 = vmatprep.subr.mxu0 0.0
    %134 = vmatpush1.msra.mxu0 0.0
    %135 = vmatprep.subr.mxu0 0.0
    %136 = vmatpush1.msra.mxu0 0.0
    %137 = vmatprep.subr.mxu0 0.0
    %138 = vmatpush1.msra.mxu0 0.0
    %139 = vmatprep.subr.mxu0 0.0
    %140 = vmatpush1.msra.mxu0 0.0
    %141 = vmatprep.subr.mxu0 0.0
    %142 = vmatpush1.msra.mxu0 0.0
    %143 = vmatprep.subr.mxu0 0.0
    %144 = vmatpush1.msra.mxu0 0.0
    %145 = vmatprep.subr.mxu0 0.0
    %146 = vmatpush1.msra.mxu0 0.0
    %147 = vmatprep.subr.mxu0 0.0
    %148 = vmatpush1.msra.mxu0 0.0
    %149 = vmatprep.subr.mxu0 0.0
    %150 = vmatpush1.msra.mxu0 0.0
    %151 = vmatprep.subr.mxu0 0.0
    %152 = vmatpush1.msra.mxu0 0.0
    %153 = vmatprep.subr.mxu0 0.0
    %154 = vmatpush1.msra.mxu0 0.0
    %155 = vmatprep.subr.mxu0 0.0
    %156 = vmatpush1.msra.mxu0 0.0
    %157 = vmatprep.subr.mxu0 0.0
    %158 = vmatpush1.msra.mxu0 0.0
    %159 = vmatprep.subr.mxu0 0.0
    %160 = vmatpush1.msra.mxu0 0.0
    %161 = vmatprep.subr.mxu0 0.0
    %162 = vmatpush1.msra.mxu0 0.0
    %163 = vmatprep.subr.mxu0 0.0
    %164 = vmatpush1.msra.mxu0 0.0
    %165 = vmatprep.subr.mxu0 0.0
    %166 = vmatpush1.msra.mxu0 0.0
    %167 = vmatprep.subr.mxu0 0.0
    %168 = vmatpush1.msra.mxu0 0.0
    %169 = vmatprep.mubr.f32.mxu0 0.0
    %170 = vmatmul.mubr.f32.gmra.mrb[0].mxu0 %v103
    %v171 = vpop.f32.mrb[0].mxu0
    %v172 = vadd.f32 %v99, %v171
    %v173 = vpop.f32.mrb[0].mxu0
    %174 = vdwg.mxu0
    %v175 = vld [vmem:[%s3] sm:$0x1]
    %v177 = vlaneseq
    %v178 = vshrl.u32 %v177, 7
    %v179 = vsub.s32 0, %v178
    %v180 = vrot.slane %v175, %v179
    %v182 = vadd.f32 %v172, %v180
    %v183 = vtanh.pop %v182
    %v184 = vmul.f32 %v183, 0.5
    %v185 = vtanh.pop %v184
    %v186 = vadd.f32 %v185, 1.0
    %v187 = vmul.f32 %v186, 0.5
    %v188 = vlaneseq
    %v189 = vand.u32 %v188, 127
    %vm190 = vcmp.eq.s32.totalorder %v189, 0
    %v191 = vsel %vm190, %v183, %v187
    %vm192 = vcmask 58368
    %193 = vst.msk [vmem:[#allocation2] sm:$0x3] %vm192, %v191
    // Predicated region
    $region18: #{tpu_custom_call.1} parent=1 // pred_check
      _
    $region19: #{tpu_custom_call.1} parent=1 // pred_check_branch
      %195 = sbr.rel (0) target = $region21
    $region20: #{tpu_custom_call.1} parent=1 // pred_region
      %s197 = ssub.s32 32, 32
      %198 = vsyncadd [#allocation3], %s197
      %s200 = sshll.u32 [#allocation2], 4
      %s201 = int_to_ptr.vmem [resolvable:$true] %s200
      %203 = dma.vmem_to_hbm [thread:$0]  %s201, 32, %s4, [#allocation3]
    $region21: #{tpu_custom_call.1} parent=1 // pred_fallthru
      _
    // Predicated region
    $region22: #{tpu_custom_call.1} parent=1 // pred_check
      _
    $region23: #{tpu_custom_call.1} parent=1 // pred_check_branch
      %205 = sbr.rel (0) target = $region25
    $region24: #{tpu_custom_call.1} parent=1 // pred_region
      %206 = dma.done [#allocation3], 32
    $region25: #{tpu_custom_call.1} parent=1 // pred_fallthru
      _
    %207 = vsyncpa [#allocation3], 1

</llo_original>
